<compile_context>
chip_gen: v7x
topology: tpu7x:2x2x1
jax: 0.10.0
libtpu: 0.0.40
codegen_flags: <defaults>
</compile_context>

<pallas_src>
import jax
import jax.numpy as jnp
from jax.experimental import pallas as pl
from jax.experimental.pallas import tpu as pltpu


def _conv1x1_bn_relu_kernel(canvas_ref, bev_ref, w1_ref, w2_ref, b_ref, o_ref):
    # Fused 1x1 conv + folded BN + ReLU, channels-first / pixels-last:
    #   out(Cout, T) = relu(w1 @ canvas(C1, T) + w2 @ bev(C2, T) + b)
    acc = jnp.dot(w1_ref[...], canvas_ref[...],
                  preferred_element_type=jnp.float32)
    acc = acc + jnp.dot(w2_ref[...], bev_ref[...],
                        preferred_element_type=jnp.float32)
    acc = acc + b_ref[...]
    o_ref[...] = jnp.maximum(acc, 0.0).astype(o_ref.dtype)


def _pick_spatial_tile(spatial, candidates=(4096, 2048, 1024, 512, 256, 128)):
    """Largest lane-dim tile (multiple of 128) that divides `spatial`,
    else a 128-aligned tile of at most 2048 (ragged tail handled by padding)."""
    for t in candidates:
        if spatial % t == 0:
            return t
    return min(2048, pl.cdiv(spatial, 128) * 128)


def conv1x1_bn_relu_cf(canvas, bev, w1, w2, b, *, tile_p):
    """Channels-first fused 1x1 conv + BN + ReLU.

    canvas: (B, C1, S) f32   bev: (B, C2, S) f32
    w1: (Cout, C1) f32       w2: (Cout, C2) f32      b: (Cout, 1) f32
    -> out: (B, Cout, S) f32.   S must be a multiple of tile_p.
    """
    B, C1, S = canvas.shape
    C2 = bev.shape[1]
    Cout = w1.shape[0]
    assert S % tile_p == 0 and tile_p % 128 == 0
    grid = (B, S // tile_p)

    return pl.pallas_call(
        _conv1x1_bn_relu_kernel,
        out_shape=jax.ShapeDtypeStruct((B, Cout, S), canvas.dtype),
        grid_spec=pltpu.PrefetchScalarGridSpec(
            num_scalar_prefetch=0,
            grid=grid,
            in_specs=[
                pl.BlockSpec((None, C1, tile_p), lambda bi, si: (bi, 0, si)),
                pl.BlockSpec((None, C2, tile_p), lambda bi, si: (bi, 0, si)),
                pl.BlockSpec((Cout, C1), lambda bi, si: (0, 0)),
                pl.BlockSpec((Cout, C2), lambda bi, si: (0, 0)),
                pl.BlockSpec((Cout, 1), lambda bi, si: (0, 0)),
            ],
            out_specs=pl.BlockSpec((None, Cout, tile_p),
                                   lambda bi, si: (bi, 0, si)),
        ),
        compiler_params=pltpu.CompilerParams(
            dimension_semantics=("parallel", "parallel")),
    )(canvas, bev, w1, w2, b)


class PointPillarsScatterExpand:
    def __init__(self, in_channels, expand_bev_channels, out_channels,
                 output_shape, remove_intensity=False, *, key,
                 dtype=jnp.float32):
        self.ny, self.nx = int(output_shape[0]), int(output_shape[1])
        self.in_channels = in_channels
        self.expand_bev_channels = expand_bev_channels
        self.out_channels = out_channels
        self.remove_intensity = remove_intensity

        input_feature_dim = expand_bev_channels + in_channels
        if remove_intensity:
            input_feature_dim -= 2
        self.input_feature_dim = input_feature_dim

        # Deterministic synthetic parameters (Conv2d 1x1 + BatchNorm2d).
        k = jax.random.split(key, 6)
        conv_w = (0.1 * jax.random.normal(
            k[0], (out_channels, input_feature_dim))).astype(dtype)
        conv_b = (0.1 * jax.random.normal(k[1], (out_channels,))).astype(dtype)
        bn_gamma = (1.0 + 0.1 * jax.random.normal(
            k[2], (out_channels,))).astype(dtype)
        bn_beta = (0.1 * jax.random.normal(k[3], (out_channels,))).astype(dtype)
        bn_mean = (0.1 * jax.random.normal(k[4], (out_channels,))).astype(dtype)
        bn_var = (1.0 + jnp.abs(
            0.1 * jax.random.normal(k[5], (out_channels,)))).astype(dtype)
        eps = 1e-5

        # TODO(synk): PyTorch BatchNorm2d in train mode uses batch statistics;
        # here BN is folded with running stats (eval-mode / inference semantics).
        scale = bn_gamma / jnp.sqrt(bn_var + eps)              # (Cout,)
        w_eff = conv_w * scale[:, None]                        # (Cout, Cin_total)
        # Split the folded weight along its input-channel rows so the concat
        # [canvas, bev] can be fused into the kernel as two separate matmuls.
        self.w_canvas = w_eff[:, :in_channels]                 # (Cout, Cin)
        self.w_bev = w_eff[:, in_channels:]                    # (Cout, Cbev_eff)
        self.b_eff = ((conv_b - bn_mean) * scale + bn_beta)[:, None]  # (Cout, 1)

    def __call__(self, voxel_features, coors, batch_size, bev_features):
        ny, nx = self.ny, self.nx
        c_in = self.in_channels
        S = ny * nx
        tile_p = _pick_spatial_tile(S)
        s_pad = pl.cdiv(S, tile_p) * tile_p

        # ---- pillar scatter (glue: data-dependent indexed write) ----
        # Scatter directly into a channels-first canvas (B, Cin, S_pad): this is
        # already the layout the kernel consumes (no transpose, no extra pad
        # pass — the canvas is allocated at padded size).
        # Note: duplicate pillar coords resolve by last-writer-wins.
        spatial_idx = (coors[:, 2] * nx + coors[:, 3]).astype(jnp.int32)
        canvas = jnp.zeros((batch_size, c_in, s_pad), voxel_features.dtype)
        canvas = canvas.at[coors[:, 0], :, spatial_idx].set(voxel_features)
        # TODO(synk): the scatter itself could also be fused into a Pallas kernel
        # (scalar-prefetched indices + input_output_aliases) to drop one more
        # canvas HBM pass; left in XLA since it is a smaller win.

        # ---- bev features slice / optional intensity removal (glue) ----
        bev = bev_features[:, :self.expand_bev_channels]       # (B, Cbev, ny, nx)
        if self.remove_intensity:
            keep = [i for i in range(self.expand_bev_channels) if i not in (2, 3)]
            bev = bev[:, jnp.array(keep, dtype=jnp.int32)]
        # NCHW already has pixels last: just merge the spatial dims (free).
        bev = bev.reshape(batch_size, bev.shape[1], S)
        if s_pad != S:
            bev = jnp.pad(bev, ((0, 0), (0, 0), (0, s_pad - S)))
        assert canvas.shape[1] + bev.shape[1] == self.input_feature_dim

        # ---- fused (concat + 1x1 conv + BN + ReLU) Pallas kernel ----
        out = conv1x1_bn_relu_cf(canvas, bev, self.w_canvas, self.w_bev,
                                 self.b_eff, tile_p=tile_p)     # (B, Cout, S_pad)

        if s_pad != S:
            # Padded columns hold relu(b) (nonzero garbage) — must be sliced off.
            out = out[:, :, :S]
        # Output is already NCHW: just split the spatial dim back (free).
        return out.reshape(batch_size, self.out_channels, ny, nx)


if __name__ == "__main__":
    key = jax.random.PRNGKey(0)
    k_param, k_vox, k_bev, k_perm = jax.random.split(key, 4)

    # Small shapes consistent with the module.
    batch_size = 2
    in_channels = 4
    expand_bev_channels = 4
    out_channels = 32
    ny, nx = 16, 16
    n_voxels_per_batch = 10
    bev_total_channels = 6   # >= expand_bev_channels

    module = PointPillarsScatterExpand(
        in_channels, expand_bev_channels, out_channels,
        output_shape=(ny, nx), remove_intensity=False, key=k_param)

    # Deterministic voxel features and unique pillar coordinates per batch.
    n_voxels = batch_size * n_voxels_per_batch
    voxel_features = jax.random.normal(
        k_vox, (n_voxels, in_channels), dtype=jnp.float32)

    coors_list = []
    perm_keys = jax.random.split(k_perm, batch_size)
    for b in range(batch_size):
        lin = jax.random.permutation(perm_keys[b], ny * nx)[:n_voxels_per_batch]
        y = lin // nx
        x = lin % nx
        bcol = jnp.full((n_voxels_per_batch,), b, dtype=jnp.int32)
        z = jnp.zeros((n_voxels_per_batch,), dtype=jnp.int32)
        coors_list.append(jnp.stack(
            [bcol, z, y.astype(jnp.int32), x.astype(jnp.int32)], axis=1))
    coors = jnp.concatenate(coors_list, axis=0)               # (N, 4)

    bev_features = jax.random.normal(
        k_bev, (batch_size, bev_total_channels, ny, nx), dtype=jnp.float32)

    out = module(voxel_features, coors, batch_size, bev_features)
    out = jax.block_until_ready(out)
    assert out.shape == (batch_size, out_channels, ny, nx)
    assert bool(jnp.all(out >= 0.0))  # ReLU output

    # Plain-JAX reference (same eval-mode BN fold) for numerical check.
    S = ny * nx
    sp = (coors[:, 2] * nx + coors[:, 3]).astype(jnp.int32)
    canvas_ref = jnp.zeros((batch_size, in_channels, S), jnp.float32)
    canvas_ref = canvas_ref.at[coors[:, 0], :, sp].set(voxel_features)
    bev_ref = bev_features[:, :expand_bev_channels].reshape(
        batch_size, expand_bev_channels, S)
    x_cat = jnp.concatenate([canvas_ref, bev_ref], axis=1)
    w_full = jnp.concatenate([module.w_canvas, module.w_bev], axis=1)
    ref = jnp.einsum('oc,bcs->bos', w_full, x_cat) + module.b_eff[None]
    ref = jnp.maximum(ref, 0.0).reshape(batch_size, out_channels, ny, nx)
    assert bool(jnp.allclose(out, ref, atol=1e-4, rtol=1e-4))

    print("KERNEL_OK")
</pallas_src>

<mosaic_0001>
module attributes {stable_mosaic.version = 11 : i64} {
  func.func @_conv1x1_bn_relu_kernel(%arg0: i32, %arg1: i32, %arg2: memref<1x4x256xf32, #tpu.memory_space<vmem>>, %arg3: memref<1x4x256xf32, #tpu.memory_space<vmem>>, %arg4: memref<32x4xf32, #tpu.memory_space<vmem>>, %arg5: memref<32x4xf32, #tpu.memory_space<vmem>>, %arg6: memref<32x1xf32, #tpu.memory_space<vmem>>, %arg7: memref<1x32x256xf32, #tpu.memory_space<vmem>>) attributes {dimension_semantics = [#tpu.dimension_semantics<parallel>, #tpu.dimension_semantics<parallel>], iteration_bounds = array<i64: 2, 1>, scalar_prefetch = 0 : i64, scratch_operands = 0 : i64, tpu.core_type = #tpu.core_type<tc>, window_params = [{transform_indices = @transform_0, window_bounds = array<i64: 1, 4, 256>}, {transform_indices = @transform_1, window_bounds = array<i64: 1, 4, 256>}, {pipeline_mode = #tpu.pipeline_mode<synchronous>, transform_indices = @transform_2, window_bounds = array<i64: 32, 4>}, {pipeline_mode = #tpu.pipeline_mode<synchronous>, transform_indices = @transform_3, window_bounds = array<i64: 32, 4>}, {pipeline_mode = #tpu.pipeline_mode<synchronous>, transform_indices = @transform_4, window_bounds = array<i64: 32, 1>}, {transform_indices = @transform_5, window_bounds = array<i64: 1, 32, 256>}]} {
    %c0 = arith.constant 0 : index
    %c0_0 = arith.constant 0 : index
    %0 = vector.load %arg4[%c0, %c0_0] : memref<32x4xf32, #tpu.memory_space<vmem>>, vector<32x4xf32>
    %c0_1 = arith.constant 0 : index
    %c0_2 = arith.constant 0 : index
    %c0_3 = arith.constant 0 : index
    %1 = vector.load %arg2[%c0_1, %c0_2, %c0_3] : memref<1x4x256xf32, #tpu.memory_space<vmem>>, vector<1x4x256xf32>
    %2 = vector.shape_cast %1 : vector<1x4x256xf32> to vector<4x256xf32>
    %cst = arith.constant dense<0.000000e+00> : vector<32x256xf32>
    %3 = tpu.matmul %0, %2, %cst {dimension_numbers = #tpu.dot_dimension_numbers<[1], [0], [0], [1], [0, 0, 1, 1], [], []>} : vector<32x4xf32>, vector<4x256xf32>, vector<32x256xf32> -> vector<32x256xf32>
    %c0_4 = arith.constant 0 : index
    %c0_5 = arith.constant 0 : index
    %4 = vector.load %arg5[%c0_4, %c0_5] : memref<32x4xf32, #tpu.memory_space<vmem>>, vector<32x4xf32>
    %c0_6 = arith.constant 0 : index
    %c0_7 = arith.constant 0 : index
    %c0_8 = arith.constant 0 : index
    %5 = vector.load %arg3[%c0_6, %c0_7, %c0_8] : memref<1x4x256xf32, #tpu.memory_space<vmem>>, vector<1x4x256xf32>
    %6 = vector.shape_cast %5 : vector<1x4x256xf32> to vector<4x256xf32>
    %cst_9 = arith.constant dense<0.000000e+00> : vector<32x256xf32>
    %7 = tpu.matmul %4, %6, %cst_9 {dimension_numbers = #tpu.dot_dimension_numbers<[1], [0], [0], [1], [0, 0, 1, 1], [], []>} : vector<32x4xf32>, vector<4x256xf32>, vector<32x256xf32> -> vector<32x256xf32>
    %8 = arith.addf %3, %7 : vector<32x256xf32>
    %c0_10 = arith.constant 0 : index
    %c0_11 = arith.constant 0 : index
    %9 = vector.load %arg6[%c0_10, %c0_11] : memref<32x1xf32, #tpu.memory_space<vmem>>, vector<32x1xf32>
    %10 = vector.broadcast %9 : vector<32x1xf32> to vector<32x256xf32>
    %11 = arith.addf %8, %10 : vector<32x256xf32>
    %cst_12 = arith.constant 0.000000e+00 : f32
    %12 = vector.broadcast %cst_12 : f32 to vector<32x256xf32>
    %13 = arith.maximumf %11, %12 : vector<32x256xf32>
    %c0_13 = arith.constant 0 : index
    %c0_14 = arith.constant 0 : index
    %c0_15 = arith.constant 0 : index
    %14 = vector.load %arg7[%c0_13, %c0_14, %c0_15] : memref<1x32x256xf32, #tpu.memory_space<vmem>>, vector<1x32x256xf32>
    %15 = vector.shape_cast %14 : vector<1x32x256xf32> to vector<32x256xf32>
    %16 = vector.shape_cast %13 : vector<32x256xf32> to vector<1x32x256xf32>
    tpu.vector_store %arg7[%c0_13, %c0_14, %c0_15], %16 {strides = array<i32>} : memref<1x32x256xf32, #tpu.memory_space<vmem>>, vector<1x32x256xf32>,
    return
  }
  func.func @transform_0(%arg0: i32, %arg1: i32) -> (i32, i32, i32) {
    %c0_i32 = arith.constant 0 : i32
    %c0_i32_0 = arith.constant 0 : i32
    return %arg0, %c0_i32, %arg1 : i32, i32, i32
  }
  func.func @transform_1(%arg0: i32, %arg1: i32) -> (i32, i32, i32) {
    %c0_i32 = arith.constant 0 : i32
    %c0_i32_0 = arith.constant 0 : i32
    return %arg0, %c0_i32, %arg1 : i32, i32, i32
  }
  func.func @transform_2(%arg0: i32, %arg1: i32) -> (i32, i32) {
    %c0_i32 = arith.constant 0 : i32
    %c0_i32_0 = arith.constant 0 : i32
    %c0_i32_1 = arith.constant 0 : i32
    return %c0_i32, %c0_i32_0 : i32, i32
  }
  func.func @transform_3(%arg0: i32, %arg1: i32) -> (i32, i32) {
    %c0_i32 = arith.constant 0 : i32
    %c0_i32_0 = arith.constant 0 : i32
    %c0_i32_1 = arith.constant 0 : i32
    return %c0_i32, %c0_i32_0 : i32, i32
  }
  func.func @transform_4(%arg0: i32, %arg1: i32) -> (i32, i32) {
    %c0_i32 = arith.constant 0 : i32
    %c0_i32_0 = arith.constant 0 : i32
    %c0_i32_1 = arith.constant 0 : i32
    return %c0_i32, %c0_i32_0 : i32, i32
  }
  func.func @transform_5(%arg0: i32, %arg1: i32) -> (i32, i32, i32) {
    %c0_i32 = arith.constant 0 : i32
    %c0_i32_0 = arith.constant 0 : i32
    return %arg0, %c0_i32, %arg1 : i32, i32, i32
  }
}

</mosaic_0001>

<llo_original>
// kernel: tpu_custom_call.1
$region0: #{tpu_custom_call.1}
  #allocation0 [shape = 'u32[]', space=smem, size = 0x4, offset = 0x4, fixed_abs, tag = 'smem constant byte address 0x4 - core index']
  #allocation1 [shape = 'u32[144,128]{1,0:T(1,128)}', space=vmem, size = 0x12000, scoped, tag = 'internal scratch']
  %s0 = inlined_call_operand.vmem [shape: f32[2,4,256], index: 0, kind: input, shape index: {}]
  %s1 = inlined_call_operand.vmem [shape: f32[2,4,256], index: 1, kind: input, shape index: {}]
  %s2 = inlined_call_operand.vmem [shape: f32[32,4], index: 2, kind: input, shape index: {}]
  %s3 = inlined_call_operand.vmem [shape: f32[32,4], index: 3, kind: input, shape index: {}]
  %s4 = inlined_call_operand.vmem [shape: f32[32,1], index: 4, kind: input, shape index: {}]
  %s5 = inlined_call_operand.hbm [shape: f32[2,32,256], index: 5, kind: output, shape index: {}]
  %s6 = sld [smem:[#allocation0]]
  $region53: #{tpu_custom_call.1} parent=0
    _
  %s8 = ssub.s32 1, %s6
  %s9 = scalar_select 0, %s8, %s6
  $region1: #{tpu_custom_call.1} parent=0
    #allocation2 [shape = 'u8[65536]{0}', space=vmem, size = 0x10000, scoped, tag = 'output window, operand 0']
    #allocation3 [shape = 's32[2]{0}', space=sflag, size = 0x8, scoped, tag = 'scoped memory for tpu_custom_call.1']
    %10 = vsyncpa [#allocation3], 0
    %s11 = scalar_lea.sflag [#allocation3], 1
    %12 = vsyncpa %s11, 0
    loop: start=0, step=1, limit=4
    $region2: #{tpu_custom_call.1} parent=1 // loop_pre_header
      _
    $region3: #{tpu_custom_call.1} parent=1 // loop_header
      %s14 = sphi 0, %s18
      %p15 = scmp.ge.s32.totalorder %s14, 4
      %s21 = sphi 0, %s33
      %s22 = sphi 0, %s29
      %s23 = sphi 0, %s21
      %s24 = sphi 0, %s22
      %s25 = sphi 0, %s23
      %s26 = sphi 0, %s24
      %s38 = sphi 0, %s40
      %s41 = sphi 0, %s38
      %s42 = sphi 0, %s41
      %s58 = sphi 0, %s42
      %s66 = sphi 0, %s68
      %s69 = sphi 0, %s66
      %s70 = sphi 0, %s69
      %s86 = sphi 0, %s70
      %s90 = sphi 0, %s90
      %s92 = sphi 0, %s90
      %s93 = sphi 0, %s92
      %s107 = sphi 0, %s93
      %s111 = sphi 0, %s111
      %s113 = sphi 0, %s111
      %s114 = sphi 0, %s113
      %s128 = sphi 0, %s114
      %s132 = sphi 0, %s132
      %s134 = sphi 0, %s132
      %s135 = sphi 0, %s134
      %s149 = sphi 0, %s135
      %s157 = sphi 0, %s159
      %s160 = sphi 0, %s157
      %s161 = sphi 0, %s160
      %s177 = sphi 0, %s161
    $region4: #{tpu_custom_call.1} parent=1 // loop_header_branch
      %17 = sbr.rel (%p15) target = $region8
    $region5: #{tpu_custom_call.1} parent=1 // loop_body
      %s19 = ssub.s32 %s14, 1
      %s20 = ssub.s32 %s14, 2
      %s27 = sadd.s32 1, %s22
      %p28 = scmp.ge.s32.totalorder %s27, 1
      %s29 = scalar_select %p28, 0, %s27
      %s30 = sadd.s32 1, %s21
      %s31 = scalar_select %p28, %s30, %s21
      %p32 = scmp.ge.s32.totalorder %s31, 2
      %s33 = scalar_select %p32, 0, %s31
      %s34 = ssub.s32 %s21, %s33
      %s35 = ssub.s32 %s22, %s29
      %s36 = sor.u32 %s34, %s35
      %p37 = scmp.eq.s32.totalorder %s36, 0
      %s39 = sadd.s32 %s38, 1
      %s40 = scalar_select %p37, %s38, %s39
      %p43 = pneg %p37
      %p44 = scmp.eq.s32.totalorder %s14, 1
      %p45 = por %p43, %p44
      %p46 = scmp.ne.s32.totalorder %s38, %s41
      %p47 = scmp.eq.s32.totalorder %s14, 0
      %p48 = por %p46, %p47
      %p49 = scmp.ne.s32.totalorder %s38, %s41
      %p50 = scmp.eq.s32.totalorder %s19, 1
      %p51 = por %p49, %p50
      %p52 = scmp.ne.s32.totalorder %s41, %s42
      %p53 = scmp.eq.s32.totalorder %s19, 0
      %p54 = por %p52, %p53
      %p55 = scmp.ne.s32.totalorder %s41, %s42
      %p56 = scmp.eq.s32.totalorder %s20, 1
      %p57 = por %p55, %p56
      %p59 = scmp.ne.s32.totalorder %s42, %s58
      %p60 = scmp.eq.s32.totalorder %s20, 0
      %p61 = por %p59, %p60
      %s62 = ssub.s32 %s21, %s33
      %s63 = ssub.s32 %s22, %s29
      %s64 = sor.u32 %s62, %s63
      %p65 = scmp.eq.s32.totalorder %s64, 0
      %s67 = sadd.s32 %s66, 1
      %s68 = scalar_select %p65, %s66, %s67
      %p71 = pneg %p65
      %p72 = scmp.eq.s32.totalorder %s14, 1
      %p73 = por %p71, %p72
      %p74 = scmp.ne.s32.totalorder %s66, %s69
      %p75 = scmp.eq.s32.totalorder %s14, 0
      %p76 = por %p74, %p75
      %p77 = scmp.ne.s32.totalorder %s66, %s69
      %p78 = scmp.eq.s32.totalorder %s19, 1
      %p79 = por %p77, %p78
      %p80 = scmp.ne.s32.totalorder %s69, %s70
      %p81 = scmp.eq.s32.totalorder %s19, 0
      %p82 = por %p80, %p81
      %p83 = scmp.ne.s32.totalorder %s69, %s70
      %p84 = scmp.eq.s32.totalorder %s20, 1
      %p85 = por %p83, %p84
      %p87 = scmp.ne.s32.totalorder %s70, %s86
      %p88 = scmp.eq.s32.totalorder %s20, 0
      %p89 = por %p87, %p88
      %s91 = sadd.s32 %s90, 1
      %p94 = scmp.eq.s32.totalorder %s14, 1
      %p95 = scmp.ne.s32.totalorder %s90, %s92
      %p96 = scmp.eq.s32.totalorder %s14, 0
      %p97 = por %p95, %p96
      %p98 = scmp.ne.s32.totalorder %s90, %s92
      %p99 = scmp.eq.s32.totalorder %s19, 1
      %p100 = por %p98, %p99
      %p101 = scmp.ne.s32.totalorder %s92, %s93
      %p102 = scmp.eq.s32.totalorder %s19, 0
      %p103 = por %p101, %p102
      %p104 = scmp.ne.s32.totalorder %s92, %s93
      %p105 = scmp.eq.s32.totalorder %s20, 1
      %p106 = por %p104, %p105
      %p108 = scmp.ne.s32.totalorder %s93, %s107
      %p109 = scmp.eq.s32.totalorder %s20, 0
      %p110 = por %p108, %p109
      %s112 = sadd.s32 %s111, 1
      %p115 = scmp.eq.s32.totalorder %s14, 1
      %p116 = scmp.ne.s32.totalorder %s111, %s113
      %p117 = scmp.eq.s32.totalorder %s14, 0
      %p118 = por %p116, %p117
      %p119 = scmp.ne.s32.totalorder %s111, %s113
      %p120 = scmp.eq.s32.totalorder %s19, 1
      %p121 = por %p119, %p120
      %p122 = scmp.ne.s32.totalorder %s113, %s114
      %p123 = scmp.eq.s32.totalorder %s19, 0
      %p124 = por %p122, %p123
      %p125 = scmp.ne.s32.totalorder %s113, %s114
      %p126 = scmp.eq.s32.totalorder %s20, 1
      %p127 = por %p125, %p126
      %p129 = scmp.ne.s32.totalorder %s114, %s128
      %p130 = scmp.eq.s32.totalorder %s20, 0
      %p131 = por %p129, %p130
      %s133 = sadd.s32 %s132, 1
      %p136 = scmp.eq.s32.totalorder %s14, 1
      %p137 = scmp.ne.s32.totalorder %s132, %s134
      %p138 = scmp.eq.s32.totalorder %s14, 0
      %p139 = por %p137, %p138
      %p140 = scmp.ne.s32.totalorder %s132, %s134
      %p141 = scmp.eq.s32.totalorder %s19, 1
      %p142 = por %p140, %p141
      %p143 = scmp.ne.s32.totalorder %s134, %s135
      %p144 = scmp.eq.s32.totalorder %s19, 0
      %p145 = por %p143, %p144
      %p146 = scmp.ne.s32.totalorder %s134, %s135
      %p147 = scmp.eq.s32.totalorder %s20, 1
      %p148 = por %p146, %p147
      %p150 = scmp.ne.s32.totalorder %s135, %s149
      %p151 = scmp.eq.s32.totalorder %s20, 0
      %p152 = por %p150, %p151
      %s153 = ssub.s32 %s21, %s33
      %s154 = ssub.s32 %s22, %s29
      %s155 = sor.u32 %s153, %s154
      %p156 = scmp.eq.s32.totalorder %s155, 0
      %s158 = sadd.s32 %s157, 1
      %s159 = scalar_select %p156, %s157, %s158
      %p162 = pneg %p156
      %p163 = scmp.eq.s32.totalorder %s14, 1
      %p164 = por %p162, %p163
      %p165 = scmp.ne.s32.totalorder %s157, %s160
      %p166 = scmp.eq.s32.totalorder %s14, 0
      %p167 = por %p165, %p166
      %p168 = scmp.ne.s32.totalorder %s157, %s160
      %p169 = scmp.eq.s32.totalorder %s19, 1
      %p170 = por %p168, %p169
      %p171 = scmp.ne.s32.totalorder %s160, %s161
      %p172 = scmp.eq.s32.totalorder %s19, 0
      %p173 = por %p171, %p172
      %p174 = scmp.ne.s32.totalorder %s160, %s161
      %p175 = scmp.eq.s32.totalorder %s20, 1
      %p176 = por %p174, %p175
      %p178 = scmp.ne.s32.totalorder %s161, %s177
      %p179 = scmp.eq.s32.totalorder %s20, 0
      %p180 = por %p178, %p179
      %p181 = scmp.le.s32.totalorder 1, %s14
      %p182 = scmp.lt.s32.totalorder %s14, 3
      %p183 = pnand %p181, %p182
      %p184 = pneg %p183
      // Predicated region
      $region9: #{tpu_custom_call.1} parent=5 // pred_check
        _
      $region10: #{tpu_custom_call.1} parent=5 // pred_check_branch
        %186 = sbr.rel (%p183) target = $region12
      $region11: #{tpu_custom_call.1} parent=5 // pred_region
        %s187 = ssub.s32 %s14, 1
        // Predicated region
        $region13: #{tpu_custom_call.1} parent=11 // pred_check
          %p188 = pneg %p103
        $region14: #{tpu_custom_call.1} parent=11 // pred_check_branch
          %190 = sbr.rel (%p188) target = $region16
        $region15: #{tpu_custom_call.1} parent=11 // pred_region
          _
        $region16: #{tpu_custom_call.1} parent=11 // pred_fallthru
          _
        // Predicated region
        $region17: #{tpu_custom_call.1} parent=11 // pred_check
          %p191 = pneg %p124
        $region18: #{tpu_custom_call.1} parent=11 // pred_check_branch
          %193 = sbr.rel (%p191) target = $region20
        $region19: #{tpu_custom_call.1} parent=11 // pred_region
          _
        $region20: #{tpu_custom_call.1} parent=11 // pred_fallthru
          _
        // Predicated region
        $region21: #{tpu_custom_call.1} parent=11 // pred_check
          %p194 = pneg %p145
        $region22: #{tpu_custom_call.1} parent=11 // pred_check_branch
          %196 = sbr.rel (%p194) target = $region24
        $region23: #{tpu_custom_call.1} parent=11 // pred_region
          _
        $region24: #{tpu_custom_call.1} parent=11 // pred_fallthru
          _
      $region12: #{tpu_custom_call.1} parent=5 // pred_fallthru
        _
      %p197 = scmp.lt.s32.totalorder %s14, 2
      // Predicated region
      $region25: #{tpu_custom_call.1} parent=5 // pred_check
        %p198 = pneg %p197
      $region26: #{tpu_custom_call.1} parent=5 // pred_check_branch
        %200 = sbr.rel (%p198) target = $region28
      $region27: #{tpu_custom_call.1} parent=5 // pred_region
        // Predicated region
        $region29: #{tpu_custom_call.1} parent=27 // pred_check
          %p201 = pneg %p48
        $region30: #{tpu_custom_call.1} parent=27 // pred_check_branch
          %203 = sbr.rel (%p201) target = $region32
        $region31: #{tpu_custom_call.1} parent=27 // pred_region
          %s204 = smul.u32 2, %s22
          %p205 = scmp.lt.s32.totalorder %s21, 1
          %s206 = scalar_select %p205, %s21, 1
          %p207 = scmp.lt.s32.totalorder %s204, 1
          %s208 = scalar_select %p207, %s204, 1
          %s209 = smul.addr %s206, 2
          %s210 = sadd.s32 %s208, %s209
          %s211 = smul.addr %s210, 4
          %s212 = scalar_lea.vmem %s0, %s211
          %s213 = smul.u32 2, %s22
        $region32: #{tpu_custom_call.1} parent=27 // pred_fallthru
          _
        // Predicated region
        $region33: #{tpu_custom_call.1} parent=27 // pred_check
          %p214 = pneg %p76
        $region34: #{tpu_custom_call.1} parent=27 // pred_check_branch
          %216 = sbr.rel (%p214) target = $region36
        $region35: #{tpu_custom_call.1} parent=27 // pred_region
          %s217 = smul.u32 2, %s22
          %p218 = scmp.lt.s32.totalorder %s21, 1
          %s219 = scalar_select %p218, %s21, 1
          %p220 = scmp.lt.s32.totalorder %s217, 1
          %s221 = scalar_select %p220, %s217, 1
          %s222 = smul.addr %s219, 2
          %s223 = sadd.s32 %s221, %s222
          %s224 = smul.addr %s223, 4
          %s225 = scalar_lea.vmem %s1, %s224
          %s226 = smul.u32 2, %s22
        $region36: #{tpu_custom_call.1} parent=27 // pred_fallthru
          _
      $region28: #{tpu_custom_call.1} parent=5 // pred_fallthru
        _
      %p227 = scmp.le.s32.totalorder 1, %s14
      %p228 = scmp.lt.s32.totalorder %s14, 3
      %p229 = pnand %p227, %p228
      %p230 = pneg %p229
      // Predicated region
      $region37: #{tpu_custom_call.1} parent=5 // pred_check
        _
      $region38: #{tpu_custom_call.1} parent=5 // pred_check_branch
        %232 = sbr.rel (%p229) target = $region40
      $region39: #{tpu_custom_call.1} parent=5 // pred_region
        %s233 = ssub.s32 %s14, 1
        %s234 = smul.u32 2, %s24
        %p235 = scmp.lt.s32.totalorder %s23, 1
        %s236 = scalar_select %p235, %s23, 1
        %p237 = scmp.lt.s32.totalorder %s234, 1
        %s238 = scalar_select %p237, %s234, 1
        %s239 = smul.addr %s236, 2
        %s240 = sadd.s32 %s238, %s239
        %s241 = smul.addr %s240, 4
        %s242 = scalar_lea.vmem %s0, %s241
        %p243 = pneg %p54
        %p244 = pneg %p51
        %s245 = smul.u32 2, %s24
        %p246 = scmp.lt.s32.totalorder %s23, 1
        %s247 = scalar_select %p246, %s23, 1
        %p248 = scmp.lt.s32.totalorder %s245, 1
        %s249 = scalar_select %p248, %s245, 1
        %s250 = smul.addr %s247, 2
        %s251 = sadd.s32 %s249, %s250
        %s252 = smul.addr %s251, 4
        %s253 = scalar_lea.vmem %s1, %s252
        %p254 = pneg %p82
        %p255 = pneg %p79
        %p256 = pneg %p103
        %p257 = pneg %p100
        %p258 = pneg %p124
        %p259 = pneg %p121
        %p260 = pneg %p145
        %p261 = pneg %p142
        %p262 = pneg %p173
        %p263 = pneg %p170
        %s264 = sand.u32 %s160, 1
        %s265 = scalar_lea.sflag [#allocation3], %s264
        %s266 = sand.u32 %s160, 1
        %s267 = smul.addr %s266, 64
        %s268 = scalar_lea.vmem [#allocation2], %s267
        %s269 = smul.u32 2, %s24
        %p270 = scmp.lt.s32.totalorder %s23, 1
        %s271 = scalar_select %p270, %s23, 1
        %p272 = scmp.lt.s32.totalorder %s269, 1
        %s273 = scalar_select %p272, %s269, 1
        %s274 = smul.addr %s271, 2
        %s275 = sadd.s32 %s273, %s274
        %s276 = smul.addr %s275, 4
        %s277 = scalar_lea.vmem %s0, %s276
        %s278 = smul.u32 2, %s24
        %s279 = smul.u32 2, %s24
        %p280 = scmp.lt.s32.totalorder %s23, 1
        %s281 = scalar_select %p280, %s23, 1
        %p282 = scmp.lt.s32.totalorder %s279, 1
        %s283 = scalar_select %p282, %s279, 1
        %s284 = smul.addr %s281, 2
        %s285 = sadd.s32 %s283, %s284
        %s286 = smul.addr %s285, 4
        %s287 = scalar_lea.vmem %s1, %s286
        %s288 = smul.u32 2, %s24
        %s289 = smul.u32 2, %s24
        %v290 = vld [vmem:[%s2] sm:$0xff]
        %v291 = vld [vmem:[%s2 + $0x8] sm:$0xff]
        %v292 = vld [vmem:[%s2 + $0x10] sm:$0xff]
        %v293 = vld [vmem:[%s2 + $0x18] sm:$0xff]
        %v294 = vld [vmem:[%s277] sm:$0xff]
        %v295 = vld [vmem:[%s3] sm:$0xff]
        %v296 = vld [vmem:[%s3 + $0x8] sm:$0xff]
        %v297 = vld [vmem:[%s3 + $0x10] sm:$0xff]
        %v298 = vld [vmem:[%s3 + $0x18] sm:$0xff]
        %v299 = vld [vmem:[%s287] sm:$0xff]
        %v301 = vcombine.high %v299, %v299
        %vm302 = vcmask 31744
        %v304 = vsel %vm302, %v295, 0
        %v307 = vsel %vm302, %v296, 0
        %v310 = vsel %vm302, %v297, 0
        %v313 = vsel %vm302, %v298, 0
        %vm315 = vcmask 1043456
        %v316 = vsel %vm315, %v299, 0
        %v318 = vsel %vm315, %v301, 0
        %320 = vmatprep.subr.mxu0 %v318
        %321 = vmatpush1.msra.mxu0 %v316
        %322 = vmatprep.subr.mxu0 0.0
        %323 = vmatpush1.msra.mxu0 0.0
        %324 = vmatprep.subr.mxu0 0.0
        %325 = vmatpush1.msra.mxu0 0.0
        %326 = vmatprep.subr.mxu0 0.0
        %327 = vmatpush1.msra.mxu0 0.0
        %328 = vmatprep.subr.mxu0 0.0
        %329 = vmatpush1.msra.mxu0 0.0
        %330 = vmatprep.subr.mxu0 0.0
        %331 = vmatpush1.msra.mxu0 0.0
        %332 = vmatprep.subr.mxu0 0.0
        %333 = vmatpush1.msra.mxu0 0.0
        %334 = vmatprep.subr.mxu0 0.0
        %335 = vmatpush1.msra.mxu0 0.0
        %336 = vmatprep.subr.mxu0 0.0
        %337 = vmatpush1.msra.mxu0 0.0
        %338 = vmatprep.subr.mxu0 0.0
        %339 = vmatpush1.msra.mxu0 0.0
        %340 = vmatprep.subr.mxu0 0.0
        %341 = vmatpush1.msra.mxu0 0.0
        %342 = vmatprep.subr.mxu0 0.0
        %343 = vmatpush1.msra.mxu0 0.0
        %344 = vmatprep.subr.mxu0 0.0
        %345 = vmatpush1.msra.mxu0 0.0
        %346 = vmatprep.subr.mxu0 0.0
        %347 = vmatpush1.msra.mxu0 0.0
        %348 = vmatprep.subr.mxu0 0.0
        %349 = vmatpush1.msra.mxu0 0.0
        %350 = vmatprep.subr.mxu0 0.0
        %351 = vmatpush1.msra.mxu0 0.0
        %352 = vmatprep.subr.mxu0 0.0
        %353 = vmatpush1.msra.mxu0 0.0
        %354 = vmatprep.subr.mxu0 0.0
        %355 = vmatpush1.msra.mxu0 0.0
        %356 = vmatprep.subr.mxu0 0.0
        %357 = vmatpush1.msra.mxu0 0.0
        %358 = vmatprep.subr.mxu0 0.0
        %359 = vmatpush1.msra.mxu0 0.0
        %360 = vmatprep.subr.mxu0 0.0
        %361 = vmatpush1.msra.mxu0 0.0
        %362 = vmatprep.subr.mxu0 0.0
        %363 = vmatpush1.msra.mxu0 0.0
        %364 = vmatprep.subr.mxu0 0.0
        %365 = vmatpush1.msra.mxu0 0.0
        %366 = vmatprep.subr.mxu0 0.0
        %367 = vmatpush1.msra.mxu0 0.0
        %368 = vmatprep.subr.mxu0 0.0
        %369 = vmatpush1.msra.mxu0 0.0
        %370 = vmatprep.subr.mxu0 0.0
        %371 = vmatpush1.msra.mxu0 0.0
        %372 = vmatprep.subr.mxu0 0.0
        %373 = vmatpush1.msra.mxu0 0.0
        %374 = vmatprep.subr.mxu0 0.0
        %375 = vmatpush1.msra.mxu0 0.0
        %376 = vmatprep.subr.mxu0 0.0
        %377 = vmatpush1.msra.mxu0 0.0
        %378 = vmatprep.subr.mxu0 0.0
        %379 = vmatpush1.msra.mxu0 0.0
        %380 = vmatprep.subr.mxu0 0.0
        %381 = vmatpush1.msra.mxu0 0.0
        %382 = vmatprep.subr.mxu0 0.0
        %383 = vmatpush1.msra.mxu0 0.0
        %384 = vmatprep.mubr.f32.mxu0 0.0
        %385 = vmatmul.mubr.f32.gmra.mrb[0].mxu0 %v304
        %v386 = vpop.f32.mrb[0].mxu0
        %v387 = vadd.f32 0.0, %v386
        %v388 = vpop.f32.mrb[0].mxu0
        %v389 = vadd.f32 0.0, %v388
        %390 = vmatprep.mubr.f32.mxu0 0.0
        %391 = vmatmul.mubr.f32.gmra.mrb[0].mxu0 %v307
        %v392 = vpop.f32.mrb[0].mxu0
        %v393 = vadd.f32 0.0, %v392
        %v394 = vpop.f32.mrb[0].mxu0
        %v395 = vadd.f32 0.0, %v394
        %396 = vmatprep.mubr.f32.mxu0 0.0
        %397 = vmatmul.mubr.f32.gmra.mrb[0].mxu0 %v310
        %v398 = vpop.f32.mrb[0].mxu0
        %v399 = vadd.f32 0.0, %v398
        %v400 = vpop.f32.mrb[0].mxu0
        %v401 = vadd.f32 0.0, %v400
        %402 = vmatprep.mubr.f32.mxu0 0.0
        %403 = vmatmul.mubr.f32.gmra.mrb[0].mxu0 %v313
        %v404 = vpop.f32.mrb[0].mxu0
        %v405 = vadd.f32 0.0, %v404
        %v406 = vpop.f32.mrb[0].mxu0
        %v407 = vadd.f32 0.0, %v406
        %408 = vdwg.mxu0
        %v410 = vcombine.high %v294, %v294
        %v412 = vsel %vm302, %v290, 0
        %v415 = vsel %vm302, %v291, 0
        %v418 = vsel %vm302, %v292, 0
        %v421 = vsel %vm302, %v293, 0
        %v423 = vsel %vm315, %v294, 0
        %v425 = vsel %vm315, %v410, 0
        %427 = vmatprep.subr.mxu0 %v425
        %428 = vmatpush1.msra.mxu0 %v423
        %429 = vmatprep.subr.mxu0 0.0
        %430 = vmatpush1.msra.mxu0 0.0
        %431 = vmatprep.subr.mxu0 0.0
        %432 = vmatpush1.msra.mxu0 0.0
        %433 = vmatprep.subr.mxu0 0.0
        %434 = vmatpush1.msra.mxu0 0.0
        %435 = vmatprep.subr.mxu0 0.0
        %436 = vmatpush1.msra.mxu0 0.0
        %437 = vmatprep.subr.mxu0 0.0
        %438 = vmatpush1.msra.mxu0 0.0
        %439 = vmatprep.subr.mxu0 0.0
        %440 = vmatpush1.msra.mxu0 0.0
        %441 = vmatprep.subr.mxu0 0.0
        %442 = vmatpush1.msra.mxu0 0.0
        %443 = vmatprep.subr.mxu0 0.0
        %444 = vmatpush1.msra.mxu0 0.0
        %445 = vmatprep.subr.mxu0 0.0
        %446 = vmatpush1.msra.mxu0 0.0
        %447 = vmatprep.subr.mxu0 0.0
        %448 = vmatpush1.msra.mxu0 0.0
        %449 = vmatprep.subr.mxu0 0.0
        %450 = vmatpush1.msra.mxu0 0.0
        %451 = vmatprep.subr.mxu0 0.0
        %452 = vmatpush1.msra.mxu0 0.0
        %453 = vmatprep.subr.mxu0 0.0
        %454 = vmatpush1.msra.mxu0 0.0
        %455 = vmatprep.subr.mxu0 0.0
        %456 = vmatpush1.msra.mxu0 0.0
        %457 = vmatprep.subr.mxu0 0.0
        %458 = vmatpush1.msra.mxu0 0.0
        %459 = vmatprep.subr.mxu0 0.0
        %460 = vmatpush1.msra.mxu0 0.0
        %461 = vmatprep.subr.mxu0 0.0
        %462 = vmatpush1.msra.mxu0 0.0
        %463 = vmatprep.subr.mxu0 0.0
        %464 = vmatpush1.msra.mxu0 0.0
        %465 = vmatprep.subr.mxu0 0.0
        %466 = vmatpush1.msra.mxu0 0.0
        %467 = vmatprep.subr.mxu0 0.0
        %468 = vmatpush1.msra.mxu0 0.0
        %469 = vmatprep.subr.mxu0 0.0
        %470 = vmatpush1.msra.mxu0 0.0
        %471 = vmatprep.subr.mxu0 0.0
        %472 = vmatpush1.msra.mxu0 0.0
        %473 = vmatprep.subr.mxu0 0.0
        %474 = vmatpush1.msra.mxu0 0.0
        %475 = vmatprep.subr.mxu0 0.0
        %476 = vmatpush1.msra.mxu0 0.0
        %477 = vmatprep.subr.mxu0 0.0
        %478 = vmatpush1.msra.mxu0 0.0
        %479 = vmatprep.subr.mxu0 0.0
        %480 = vmatpush1.msra.mxu0 0.0
        %481 = vmatprep.subr.mxu0 0.0
        %482 = vmatpush1.msra.mxu0 0.0
        %483 = vmatprep.subr.mxu0 0.0
        %484 = vmatpush1.msra.mxu0 0.0
        %485 = vmatprep.subr.mxu0 0.0
        %486 = vmatpush1.msra.mxu0 0.0
        %487 = vmatprep.subr.mxu0 0.0
        %488 = vmatpush1.msra.mxu0 0.0
        %489 = vmatprep.subr.mxu0 0.0
        %490 = vmatpush1.msra.mxu0 0.0
        %491 = vmatprep.mubr.f32.mxu0 0.0
        %492 = vmatmul.mubr.f32.gmra.mrb[0].mxu0 %v412
        %v493 = vpop.f32.mrb[0].mxu0
        %v494 = vadd.f32 %v387, %v493
        %v495 = vpop.f32.mrb[0].mxu0
        %v496 = vadd.f32 %v389, %v495
        %497 = vmatprep.mubr.f32.mxu0 0.0
        %498 = vmatmul.mubr.f32.gmra.mrb[0].mxu0 %v415
        %v499 = vpop.f32.mrb[0].mxu0
        %v500 = vadd.f32 %v393, %v499
        %v501 = vpop.f32.mrb[0].mxu0
        %v502 = vadd.f32 %v395, %v501
        %503 = vmatprep.mubr.f32.mxu0 0.0
        %504 = vmatmul.mubr.f32.gmra.mrb[0].mxu0 %v418
        %v505 = vpop.f32.mrb[0].mxu0
        %v506 = vadd.f32 %v399, %v505
        %v507 = vpop.f32.mrb[0].mxu0
        %v508 = vadd.f32 %v401, %v507
        %509 = vmatprep.mubr.f32.mxu0 0.0
        %510 = vmatmul.mubr.f32.gmra.mrb[0].mxu0 %v421
        %v511 = vpop.f32.mrb[0].mxu0
        %v512 = vadd.f32 %v405, %v511
        %v513 = vpop.f32.mrb[0].mxu0
        %v514 = vadd.f32 %v407, %v513
        %515 = vdwg.mxu0
        %v516 = vld [vmem:[%s4] sm:$0xff]
        %v517 = vld [vmem:[%s4 + $0x8] sm:$0xff]
        %v518 = vld [vmem:[%s4 + $0x10] sm:$0xff]
        %v519 = vld [vmem:[%s4 + $0x18] sm:$0xff]
        %521 = vset.pattern.permute.xlu0 0
        %522 = vperm.xlu0 %521, %v516
        %v523 = vpop.permute.xlu0 %522
        %526 = vset.pattern.permute.xlu0 0
        %527 = vperm.xlu0 %526, %v517
        %v528 = vpop.permute.xlu0 %527
        %531 = vset.pattern.permute.xlu0 0
        %532 = vperm.xlu0 %531, %v518
        %v533 = vpop.permute.xlu0 %532
        %536 = vset.pattern.permute.xlu0 0
        %537 = vperm.xlu0 %536, %v519
        %v538 = vpop.permute.xlu0 %537
        %v540 = vadd.f32 %v494, %v523
        %v541 = vadd.f32 %v496, %v523
        %v542 = vadd.f32 %v500, %v528
        %v543 = vadd.f32 %v502, %v528
        %v544 = vadd.f32 %v506, %v533
        %v545 = vadd.f32 %v508, %v533
        %v546 = vadd.f32 %v512, %v538
        %v547 = vadd.f32 %v514, %v538
        %v548 = vmax.f32 %v540, 0.0
        %v549 = vmax.f32 %v541, 0.0
        %v550 = vmax.f32 %v542, 0.0
        %v551 = vmax.f32 %v543, 0.0
        %v552 = vmax.f32 %v544, 0.0
        %v553 = vmax.f32 %v545, 0.0
        %v554 = vmax.f32 %v546, 0.0
        %v555 = vmax.f32 %v547, 0.0
        %556 = vst [vmem:[%s268] sm:$0xff] %v548
        %557 = vst [vmem:[%s268 + $0x8] sm:$0xff] %v549
        %558 = vst [vmem:[%s268 + $0x10] sm:$0xff] %v550
        %559 = vst [vmem:[%s268 + $0x18] sm:$0xff] %v551
        %560 = vst [vmem:[%s268 + $0x20] sm:$0xff] %v552
        %561 = vst [vmem:[%s268 + $0x28] sm:$0xff] %v553
        %562 = vst [vmem:[%s268 + $0x30] sm:$0xff] %v554
        %563 = vst [vmem:[%s268 + $0x38] sm:$0xff] %v555
        %s564 = sand.u32 %s160, 1
        %s565 = scalar_lea.sflag [#allocation3], %s564
        %s566 = sand.u32 %s160, 1
        %s567 = smul.addr %s566, 64
        %s568 = scalar_lea.vmem [#allocation2], %s567
        // Predicated region
        $region41: #{tpu_custom_call.1} parent=39 // pred_check
          %p569 = pneg %p170
        $region42: #{tpu_custom_call.1} parent=39 // pred_check_branch
          %571 = sbr.rel (%p569) target = $region44
        $region43: #{tpu_custom_call.1} parent=39 // pred_region
          %s572 = smul.u32 2, %s24
          %s574 = ssub.s32 1024, 1024
          %575 = vsyncadd %s565, %s574
          %s576 = smul.addr %s23, 8
          %s577 = sadd.s32 %s572, %s576
          %s578 = smul.addr %s577, 128
          %s579 = scalar_lea.hbm %s5, %s578
          %s580 = sshll.u32 %s568, 4
          %s581 = int_to_ptr.vmem [resolvable:$true] %s580
          %586 = dma.vmem_to_hbm [thread:$0]  %s581, 1024, %s579, %s565, 256, 256, 16
        $region44: #{tpu_custom_call.1} parent=39 // pred_fallthru
          _
      $region40: #{tpu_custom_call.1} parent=5 // pred_fallthru
        _
      %p587 = scmp.le.s32.totalorder 2, %s14
      // Predicated region
      $region45: #{tpu_custom_call.1} parent=5 // pred_check
        %p588 = pneg %p587
      $region46: #{tpu_custom_call.1} parent=5 // pred_check_branch
        %590 = sbr.rel (%p588) target = $region48
      $region47: #{tpu_custom_call.1} parent=5 // pred_region
        %s591 = ssub.s32 %s14, 2
        // Predicated region
        $region49: #{tpu_custom_call.1} parent=47 // pred_check
          %p592 = pneg %p176
        $region50: #{tpu_custom_call.1} parent=47 // pred_check_branch
          %594 = sbr.rel (%p592) target = $region52
        $region51: #{tpu_custom_call.1} parent=47 // pred_region
          %s595 = sand.u32 %s161, 1
          %s596 = scalar_lea.sflag [#allocation3], %s595
          %s597 = sand.u32 %s161, 1
          %s598 = smul.addr %s597, 64
          %s599 = scalar_lea.vmem [#allocation2], %s598
          %600 = dma.done %s596, 1024
        $region52: #{tpu_custom_call.1} parent=47 // pred_fallthru
          _
      $region48: #{tpu_custom_call.1} parent=5 // pred_fallthru
        _
    $region6: #{tpu_custom_call.1} parent=1 // loop_footer
      %s18 = sadd.s32 1, %s14
    $region7: #{tpu_custom_call.1} parent=1 // loop_footer_branch
      %13 = sbr.rel target = $region3
    $region8: #{tpu_custom_call.1} parent=1 // loop_exit
      _
    %601 = vsyncpa [#allocation3], 1
    %s602 = scalar_lea.sflag [#allocation3], 1
    %603 = vsyncpa %s602, 1

</llo_original>
